<compile_context>
chip_gen: v7x
topology: tpu7x:2x2x1
jax: 0.10.0
libtpu: 0.0.40
codegen_flags: <defaults>
</compile_context>

<pallas_src>
import jax
import jax.numpy as jnp
from jax import lax
from jax.experimental import pallas as pl
from jax.experimental.pallas import tpu as pltpu


_LANES = 128


def _newton_reciprocal(denom):
    # EUP approx reciprocal (vrcp slot, otherwise idle) + one Newton refinement
    # step -> ~f32 accuracy, and keeps the VALU free of a full divide.
    r = pl.reciprocal(denom, approx=True)
    return r * (2.0 - denom * r)


def _fixed_answers_kernel_simple(x_ref, w_ref, b_ref, o_ref):
    # x: (TB, F), w: (C, F) [PyTorch layout, contract on F], b: (1, C) -> o: (TB, C)
    logits = lax.dot_general(
        x_ref[...], w_ref[...],
        dimension_numbers=(((1,), (1,)), ((), ())),   # x @ w.T on the MXU
        preferred_element_type=jnp.float32,
    )
    logits = logits + b_ref[...]                      # broadcast (1, C) over rows
    m = jnp.max(logits, axis=-1, keepdims=True)
    e = jnp.exp(logits - m)
    denom = jnp.sum(e, axis=-1, keepdims=True)
    o_ref[...] = (e * _newton_reciprocal(denom)).astype(o_ref.dtype)


def _fixed_answers_kernel_packed(xp_ref, wbd_ref, b_ref, seg_ref, o_ref):
    # xp: (TB, P*F), wbd: (P*F, 128) block-diag W^T, b: (1, 128),
    # seg: (128, 128) block-diag ones -> o: (TB, 128); each C-lane group is one
    # original row's softmax.
    logits = jnp.dot(xp_ref[...], wbd_ref[...], preferred_element_type=jnp.float32)
    logits = logits + b_ref[...]
    # Row max over all 128 lanes: it is constant within each C-lane group, so by
    # softmax shift-invariance the per-group result is identical to using the
    # per-group max (up to rounding).  Only a pathological logit spread (> ~80
    # absolute across the P rows packed into one vreg row) could underflow an
    # entire group; such inputs can use the simple path instead.
    m = jnp.max(logits, axis=-1, keepdims=True)
    e = jnp.exp(logits - m)
    # Segmented (per C-lane group) sum, replicated across the group, as one MXU
    # matmul against a block-diagonal ones matrix (MXU is idle during softmax).
    denom = jnp.dot(e, seg_ref[...], preferred_element_type=jnp.float32)
    o_ref[...] = (e * _newton_reciprocal(denom)).astype(o_ref.dtype)


def _pick_block_rows(n_rows, row_bytes, *, vmem_budget=16 * 1024 * 1024, cap=4096):
    """Rows per grid step: a single step for small batches; otherwise the largest
    multiple of 8 whose double-buffered in+out tiles fit a conservative VMEM
    budget, capped at `cap`."""
    fit = max(8, ((vmem_budget // (2 * max(row_bytes, 1))) // 8) * 8)
    block = int(min(cap, fit))
    if n_rows <= block:
        return n_rows            # no tiling for small batches -> one grid step
    return block


def _call_simple(x, weight, bias2d):
    B, F = x.shape
    C = weight.shape[0]
    block_b = _pick_block_rows(B, 4 * (F + C))
    grid_b = pl.cdiv(B, block_b)
    return pl.pallas_call(
        _fixed_answers_kernel_simple,
        out_shape=jax.ShapeDtypeStruct((B, C), jnp.float32),
        grid=(grid_b,),
        in_specs=[
            pl.BlockSpec((block_b, F), lambda i: (i, 0)),  # x: tiled over batch
            pl.BlockSpec((C, F), lambda i: (0, 0)),        # weight: resident
            pl.BlockSpec((1, C), lambda i: (0, 0)),        # bias: resident
        ],
        out_specs=pl.BlockSpec((block_b, C), lambda i: (i, 0)),
        compiler_params=pltpu.CompilerParams(
            dimension_semantics=("parallel",)),
    )(x, weight, bias2d)


def _call_packed(x, weight, bias):
    B, F = x.shape
    C = weight.shape[0]
    P = _LANES // C
    Bp = B // P

    # Parameter-only repack (cache these in a real deployment).
    wt = weight.T.astype(jnp.float32)                         # (F, C)
    wbd = jnp.kron(jnp.eye(P, dtype=jnp.float32), wt)         # (P*F, 128) block-diag
    bias_t = jnp.tile(bias.astype(jnp.float32), P).reshape(1, _LANES)
    seg = jnp.kron(jnp.eye(P, dtype=jnp.float32),
                   jnp.ones((C, C), jnp.float32))             # (128, 128)

    xp = x.reshape(Bp, P * F)                                 # free row-major reshape
    block_bp = _pick_block_rows(Bp, 4 * (P * F + _LANES))
    grid_bp = pl.cdiv(Bp, block_bp)

    out_p = pl.pallas_call(
        _fixed_answers_kernel_packed,
        out_shape=jax.ShapeDtypeStruct((Bp, _LANES), jnp.float32),
        grid=(grid_bp,),
        in_specs=[
            pl.BlockSpec((block_bp, P * F), lambda i: (i, 0)),  # packed x, tiled
            pl.BlockSpec((P * F, _LANES), lambda i: (0, 0)),    # block-diag W^T
            pl.BlockSpec((1, _LANES), lambda i: (0, 0)),        # tiled bias
            pl.BlockSpec((_LANES, _LANES), lambda i: (0, 0)),   # segment-sum ones
        ],
        out_specs=pl.BlockSpec((block_bp, _LANES), lambda i: (i, 0)),
        compiler_params=pltpu.CompilerParams(
            dimension_semantics=("parallel",)),
    )(xp, wbd, bias_t, seg)
    return out_p.reshape(B, C)                                # free row-major reshape


def fixed_answers_predictor(que_final, weight, bias):
    """que_final: (B, F) f32; weight: (C, F) f32 (PyTorch nn.Linear layout);
    bias: (C,).  Returns softmax(que_final @ weight.T + bias, axis=-1) -> (B, C)."""
    B, _ = que_final.shape
    C = weight.shape[0]
    use_packed = (_LANES % C == 0) and ((_LANES // C) >= 2) and (B % (_LANES // C) == 0)
    if use_packed:
        return _call_packed(que_final, weight, bias)
    return _call_simple(que_final, weight, bias.reshape(1, C))


if __name__ == "__main__":
    key = jax.random.PRNGKey(0)
    k_x, k_w, k_b, k_x2, k_w2, k_b2 = jax.random.split(key, 6)

    # --- Primary shapes (module defaults): exercises the packed, lane-dense path.
    batch = 16
    ques_final_size = 32
    fixed_answers_len = 15              # output dim = fixed_answers_len + 1 = 16
    out_dim = fixed_answers_len + 1
    bound = 1.0 / (ques_final_size ** 0.5)

    weight = jax.random.uniform(k_w, (out_dim, ques_final_size),
                                minval=-bound, maxval=bound, dtype=jnp.float32)
    bias = jax.random.uniform(k_b, (out_dim,),
                              minval=-bound, maxval=bound, dtype=jnp.float32)
    que_final = jax.random.normal(k_x, (batch, ques_final_size), dtype=jnp.float32)

    out = jax.block_until_ready(fixed_answers_predictor(que_final, weight, bias))
    ref = jax.nn.softmax(que_final @ weight.T + bias, axis=-1)
    assert out.shape == (batch, out_dim)
    assert jnp.allclose(out, ref, atol=1e-5, rtol=1e-5)
    assert jnp.allclose(jnp.sum(out, axis=-1), 1.0, atol=1e-5)

    # --- Odd shapes (C does not divide 128): exercises the fallback simple path.
    batch2, feat2, out2 = 10, 32, 13    # fixed_answers_len = 12
    bound2 = 1.0 / (feat2 ** 0.5)
    weight2 = jax.random.uniform(k_w2, (out2, feat2), minval=-bound2,
                                 maxval=bound2, dtype=jnp.float32)
    bias2 = jax.random.uniform(k_b2, (out2,), minval=-bound2,
                               maxval=bound2, dtype=jnp.float32)
    x2 = jax.random.normal(k_x2, (batch2, feat2), dtype=jnp.float32)
    out_b = jax.block_until_ready(fixed_answers_predictor(x2, weight2, bias2))
    ref_b = jax.nn.softmax(x2 @ weight2.T + bias2, axis=-1)
    assert out_b.shape == (batch2, out2)
    assert jnp.allclose(out_b, ref_b, atol=1e-5, rtol=1e-5)

    print("KERNEL_OK")
</pallas_src>

<mosaic_0001>
module attributes {stable_mosaic.version = 11 : i64} {
  func.func @_fixed_answers_kernel_packed(%arg0: i32, %arg1: memref<2x256xf32, #tpu.memory_space<vmem>>, %arg2: memref<256x128xf32, #tpu.memory_space<vmem>>, %arg3: memref<1x128xf32, #tpu.memory_space<vmem>>, %arg4: memref<128x128xf32, #tpu.memory_space<vmem>>, %arg5: memref<2x128xf32, #tpu.memory_space<vmem>>) attributes {dimension_semantics = [#tpu.dimension_semantics<parallel>], iteration_bounds = array<i64: 1>, scalar_prefetch = 0 : i64, scratch_operands = 0 : i64, tpu.core_type = #tpu.core_type<tc>, window_params = [{transform_indices = @transform_0, window_bounds = array<i64: 2, 256>}, {pipeline_mode = #tpu.pipeline_mode<synchronous>, transform_indices = @transform_1, window_bounds = array<i64: 256, 128>}, {pipeline_mode = #tpu.pipeline_mode<synchronous>, transform_indices = @transform_2, window_bounds = array<i64: 1, 128>}, {pipeline_mode = #tpu.pipeline_mode<synchronous>, transform_indices = @transform_3, window_bounds = array<i64: 128, 128>}, {transform_indices = @transform_4, window_bounds = array<i64: 2, 128>}]} {
    %c0 = arith.constant 0 : index
    %c0_0 = arith.constant 0 : index
    %0 = vector.load %arg1[%c0, %c0_0] : memref<2x256xf32, #tpu.memory_space<vmem>>, vector<2x256xf32>
    %c0_1 = arith.constant 0 : index
    %c0_2 = arith.constant 0 : index
    %1 = vector.load %arg2[%c0_1, %c0_2] : memref<256x128xf32, #tpu.memory_space<vmem>>, vector<256x128xf32>
    %cst = arith.constant dense<0.000000e+00> : vector<2x128xf32>
    %2 = tpu.matmul %0, %1, %cst {dimension_numbers = #tpu.dot_dimension_numbers<[1], [0], [0], [1], [0, 0, 1, 1], [], []>} : vector<2x256xf32>, vector<256x128xf32>, vector<2x128xf32> -> vector<2x128xf32>
    %c0_3 = arith.constant 0 : index
    %c0_4 = arith.constant 0 : index
    %3 = vector.load %arg3[%c0_3, %c0_4] : memref<1x128xf32, #tpu.memory_space<vmem>>, vector<1x128xf32>
    %4 = vector.broadcast %3 : vector<1x128xf32> to vector<2x128xf32>
    %5 = arith.addf %2, %4 : vector<2x128xf32>
    %cst_5 = arith.constant dense<0xFF800000> : vector<2xf32>
    %6 = vector.multi_reduction <maximumf>, %5, %cst_5 [1] : vector<2x128xf32> to vector<2xf32>
    %7 = vector.shape_cast %6 : vector<2xf32> to vector<2x1xf32>
    %8 = vector.broadcast %7 : vector<2x1xf32> to vector<2x128xf32>
    %9 = arith.subf %5, %8 : vector<2x128xf32>
    %10 = math.exp %9 : vector<2x128xf32>
    %c0_6 = arith.constant 0 : index
    %c0_7 = arith.constant 0 : index
    %11 = vector.load %arg4[%c0_6, %c0_7] : memref<128x128xf32, #tpu.memory_space<vmem>>, vector<128x128xf32>
    %cst_8 = arith.constant dense<0.000000e+00> : vector<2x128xf32>
    %12 = tpu.matmul %10, %11, %cst_8 {dimension_numbers = #tpu.dot_dimension_numbers<[1], [0], [0], [1], [0, 0, 1, 1], [], []>} : vector<2x128xf32>, vector<128x128xf32>, vector<2x128xf32> -> vector<2x128xf32>
    %13 = tpu.reciprocal %12 {approx = true} : vector<2x128xf32> -> vector<2x128xf32>
    %14 = arith.mulf %12, %13 : vector<2x128xf32>
    %cst_9 = arith.constant 2.000000e+00 : f32
    %15 = vector.broadcast %cst_9 : f32 to vector<2x128xf32>
    %16 = arith.subf %15, %14 : vector<2x128xf32>
    %17 = arith.mulf %13, %16 : vector<2x128xf32>
    %18 = arith.mulf %10, %17 : vector<2x128xf32>
    %c0_10 = arith.constant 0 : index
    %c0_11 = arith.constant 0 : index
    %19 = vector.load %arg5[%c0_10, %c0_11] : memref<2x128xf32, #tpu.memory_space<vmem>>, vector<2x128xf32>
    tpu.vector_store %arg5[%c0_10, %c0_11], %18 {strides = array<i32>} : memref<2x128xf32, #tpu.memory_space<vmem>>, vector<2x128xf32>,
    return
  }
  func.func @transform_0(%arg0: i32) -> (i32, i32) {
    %c0_i32 = arith.constant 0 : i32
    %c0_i32_0 = arith.constant 0 : i32
    return %arg0, %c0_i32 : i32, i32
  }
  func.func @transform_1(%arg0: i32) -> (i32, i32) {
    %c0_i32 = arith.constant 0 : i32
    %c0_i32_0 = arith.constant 0 : i32
    %c0_i32_1 = arith.constant 0 : i32
    return %c0_i32, %c0_i32_0 : i32, i32
  }
  func.func @transform_2(%arg0: i32) -> (i32, i32) {
    %c0_i32 = arith.constant 0 : i32
    %c0_i32_0 = arith.constant 0 : i32
    %c0_i32_1 = arith.constant 0 : i32
    return %c0_i32, %c0_i32_0 : i32, i32
  }
  func.func @transform_3(%arg0: i32) -> (i32, i32) {
    %c0_i32 = arith.constant 0 : i32
    %c0_i32_0 = arith.constant 0 : i32
    %c0_i32_1 = arith.constant 0 : i32
    return %c0_i32, %c0_i32_0 : i32, i32
  }
  func.func @transform_4(%arg0: i32) -> (i32, i32) {
    %c0_i32 = arith.constant 0 : i32
    %c0_i32_0 = arith.constant 0 : i32
    return %arg0, %c0_i32 : i32, i32
  }
}

</mosaic_0001>

<llo_original>
// kernel: tpu_custom_call.1
$region0: #{tpu_custom_call.1}
  #allocation0 [shape = 'u32[]', space=smem, size = 0x4, offset = 0x4, fixed_abs, tag = 'smem constant byte address 0x4 - core index']
  #allocation1 [shape = 'u32[144,128]{1,0:T(1,128)}', space=vmem, size = 0x12000, scoped, tag = 'internal scratch']
  %s0 = inlined_call_operand.hbm [shape: f32[2,256], index: 0, kind: input, shape index: {}]
  %s1 = inlined_call_operand.hbm [shape: f32[256,128], index: 1, kind: input, shape index: {}]
  %s2 = inlined_call_operand.vmem [shape: f32[1,128], index: 2, kind: input, shape index: {}]
  %s3 = inlined_call_operand.hbm [shape: f32[128,128], index: 3, kind: input, shape index: {}]
  %s4 = inlined_call_operand.hbm [shape: f32[2,128], index: 4, kind: output, shape index: {}]
  %s5 = sld [smem:[#allocation0]]
  $region38: #{tpu_custom_call.1} parent=0
    _
  %s7 = ssub.s32 1, %s5
  %s8 = scalar_select 0, %s7, %s5
  $region1: #{tpu_custom_call.1} parent=0
    #allocation2 [shape = 'u8[2048]{0}', space=vmem, size = 0x800, scoped, tag = 'input window, operand 0, single buffered']
    #allocation3 [shape = 's32[1]{0}', space=sflag, size = 0x4, scoped, tag = 'scoped memory for tpu_custom_call.1']
    #allocation4 [shape = 's32[1]{0}', space=sflag, size = 0x4, scoped, tag = 'scoped memory for tpu_custom_call.1']
    #allocation5 [shape = 'u8[131072]{0}', space=vmem, size = 0x20000, scoped, tag = 'input window, operand 1, single buffered']
    #allocation6 [shape = 's32[1]{0}', space=sflag, size = 0x4, scoped, tag = 'scoped memory for tpu_custom_call.1']
    #allocation7 [shape = 'u8[65536]{0}', space=vmem, size = 0x10000, scoped, tag = 'input window, operand 3, single buffered']
    #allocation8 [shape = 'u8[1024]{0}', space=vmem, size = 0x400, scoped, tag = 'output window, operand 0, single buffered']
    %9 = vsyncpa [#allocation3], 0
    %10 = vsyncpa [#allocation6], 0
    %11 = vsyncpa [#allocation4], 0
    // Predicated region
    $region2: #{tpu_custom_call.1} parent=1 // pred_check
      _
    $region3: #{tpu_custom_call.1} parent=1 // pred_check_branch
      %13 = sbr.rel (0) target = $region5
    $region4: #{tpu_custom_call.1} parent=1 // pred_region
      %s15 = ssub.s32 64, 64
      %16 = vsyncadd [#allocation3], %s15
      %s18 = sshll.u32 [#allocation2], 4
      %s19 = int_to_ptr.vmem [resolvable:$true] %s18
      %21 = dma.hbm_to_vmem [thread:$0]  %s0, 64, %s19, [#allocation3]
    $region5: #{tpu_custom_call.1} parent=1 // pred_fallthru
      _
    // Predicated region
    $region6: #{tpu_custom_call.1} parent=1 // pred_check
      _
    $region7: #{tpu_custom_call.1} parent=1 // pred_check_branch
      %23 = sbr.rel (0) target = $region9
    $region8: #{tpu_custom_call.1} parent=1 // pred_region
      %s25 = ssub.s32 4096, 4096
      %26 = vsyncadd [#allocation6], %s25
      %s27 = sshll.u32 [#allocation5], 4
      %s28 = int_to_ptr.vmem [resolvable:$true] %s27
      %33 = dma.hbm_to_vmem [thread:$0]  %s1, 4096, %s28, [#allocation6], 128, 128, 8
    $region9: #{tpu_custom_call.1} parent=1 // pred_fallthru
      _
    // Predicated region
    $region10: #{tpu_custom_call.1} parent=1 // pred_check
      _
    $region11: #{tpu_custom_call.1} parent=1 // pred_check_branch
      %35 = sbr.rel (0) target = $region13
    $region12: #{tpu_custom_call.1} parent=1 // pred_region
      _
    $region13: #{tpu_custom_call.1} parent=1 // pred_fallthru
      _
    // Predicated region
    $region14: #{tpu_custom_call.1} parent=1 // pred_check
      _
    $region15: #{tpu_custom_call.1} parent=1 // pred_check_branch
      %37 = sbr.rel (0) target = $region17
    $region16: #{tpu_custom_call.1} parent=1 // pred_region
      %s39 = ssub.s32 2048, 2048
      %40 = vsyncadd [#allocation6], %s39
      %s41 = sshll.u32 [#allocation7], 4
      %s42 = int_to_ptr.vmem [resolvable:$true] %s41
      %47 = dma.hbm_to_vmem [thread:$0]  %s3, 2048, %s42, [#allocation6], 128, 128, 8
    $region17: #{tpu_custom_call.1} parent=1 // pred_fallthru
      _
    // Predicated region
    $region18: #{tpu_custom_call.1} parent=1 // pred_check
      _
    $region19: #{tpu_custom_call.1} parent=1 // pred_check_branch
      %49 = sbr.rel (0) target = $region21
    $region20: #{tpu_custom_call.1} parent=1 // pred_region
      %50 = dma.done [#allocation3], 64
    $region21: #{tpu_custom_call.1} parent=1 // pred_fallthru
      _
    // Predicated region
    $region22: #{tpu_custom_call.1} parent=1 // pred_check
      _
    $region23: #{tpu_custom_call.1} parent=1 // pred_check_branch
      %52 = sbr.rel (0) target = $region25
    $region24: #{tpu_custom_call.1} parent=1 // pred_region
      %53 = dma.done [#allocation6], 4096
    $region25: #{tpu_custom_call.1} parent=1 // pred_fallthru
      _
    // Predicated region
    $region26: #{tpu_custom_call.1} parent=1 // pred_check
      _
    $region27: #{tpu_custom_call.1} parent=1 // pred_check_branch
      %55 = sbr.rel (0) target = $region29
    $region28: #{tpu_custom_call.1} parent=1 // pred_region
      %56 = dma.done [#allocation6], 2048
    $region29: #{tpu_custom_call.1} parent=1 // pred_fallthru
      _
    %v57 = vld [vmem:[#allocation2] sm:$0xf]
    %v58 = vld [vmem:[#allocation5] sm:$0xff]
    %v59 = vld [vmem:[#allocation5 + $0x8] sm:$0xff]
    %v60 = vld [vmem:[#allocation5 + $0x10] sm:$0xff]
    %v61 = vld [vmem:[#allocation5 + $0x18] sm:$0xff]
    %v62 = vld [vmem:[#allocation5 + $0x20] sm:$0xff]
    %v63 = vld [vmem:[#allocation5 + $0x28] sm:$0xff]
    %v64 = vld [vmem:[#allocation5 + $0x30] sm:$0xff]
    %v65 = vld [vmem:[#allocation5 + $0x38] sm:$0xff]
    %v66 = vld [vmem:[#allocation5 + $0x40] sm:$0xff]
    %v67 = vld [vmem:[#allocation5 + $0x48] sm:$0xff]
    %v68 = vld [vmem:[#allocation5 + $0x50] sm:$0xff]
    %v69 = vld [vmem:[#allocation5 + $0x58] sm:$0xff]
    %v70 = vld [vmem:[#allocation5 + $0x60] sm:$0xff]
    %v71 = vld [vmem:[#allocation5 + $0x68] sm:$0xff]
    %v72 = vld [vmem:[#allocation5 + $0x70] sm:$0xff]
    %v73 = vld [vmem:[#allocation5 + $0x78] sm:$0xff]
    %v74 = vld [vmem:[#allocation5 + $0x80] sm:$0xff]
    %v75 = vld [vmem:[#allocation5 + $0x88] sm:$0xff]
    %v76 = vld [vmem:[#allocation5 + $0x90] sm:$0xff]
    %v77 = vld [vmem:[#allocation5 + $0x98] sm:$0xff]
    %v78 = vld [vmem:[#allocation5 + $0xa0] sm:$0xff]
    %v79 = vld [vmem:[#allocation5 + $0xa8] sm:$0xff]
    %v80 = vld [vmem:[#allocation5 + $0xb0] sm:$0xff]
    %v81 = vld [vmem:[#allocation5 + $0xb8] sm:$0xff]
    %v82 = vld [vmem:[#allocation5 + $0xc0] sm:$0xff]
    %v83 = vld [vmem:[#allocation5 + $0xc8] sm:$0xff]
    %v84 = vld [vmem:[#allocation5 + $0xd0] sm:$0xff]
    %v85 = vld [vmem:[#allocation5 + $0xd8] sm:$0xff]
    %v86 = vld [vmem:[#allocation5 + $0xe0] sm:$0xff]
    %v87 = vld [vmem:[#allocation5 + $0xe8] sm:$0xff]
    %v88 = vld [vmem:[#allocation5 + $0xf0] sm:$0xff]
    %v89 = vld [vmem:[#allocation5 + $0xf8] sm:$0xff]
    %v90 = vld [vmem:[%s2] sm:$0x1]
    %v92 = vlaneseq
    %v93 = vshrl.u32 %v92, 7
    %v94 = vsub.s32 0, %v93
    %v95 = vrot.slane %v90, %v94
    %v99 = vunpack.c.l.s4 1983009808
    %v100 = vunpack.c.0.s8 %v99
    %v101 = vlaneseq
    %v102 = vshrl.u32 %v101, 7
    %v103 = vsub.s32 %v100, %v102
    %v104 = vrot.slane %v57, %v103
    %v105 = vcombine.high %v104, %v104
    %108 = vmatprep.subr.mxu0 0.0
    %109 = vmatpush1.msra.mxu0 %v58
    %110 = vmatprep.subr.mxu0 0.0
    %111 = vmatpush1.msra.mxu0 %v59
    %112 = vmatprep.subr.mxu0 0.0
    %113 = vmatpush1.msra.mxu0 %v60
    %114 = vmatprep.subr.mxu0 0.0
    %115 = vmatpush1.msra.mxu0 %v61
    %116 = vmatprep.subr.mxu0 0.0
    %117 = vmatpush1.msra.mxu0 %v62
    %118 = vmatprep.subr.mxu0 0.0
    %119 = vmatpush1.msra.mxu0 %v63
    %120 = vmatprep.subr.mxu0 0.0
    %121 = vmatpush1.msra.mxu0 %v64
    %122 = vmatprep.subr.mxu0 0.0
    %123 = vmatpush1.msra.mxu0 %v65
    %124 = vmatprep.subr.mxu0 0.0
    %125 = vmatpush1.msra.mxu0 %v66
    %126 = vmatprep.subr.mxu0 0.0
    %127 = vmatpush1.msra.mxu0 %v67
    %128 = vmatprep.subr.mxu0 0.0
    %129 = vmatpush1.msra.mxu0 %v68
    %130 = vmatprep.subr.mxu0 0.0
    %131 = vmatpush1.msra.mxu0 %v69
    %132 = vmatprep.subr.mxu0 0.0
    %133 = vmatpush1.msra.mxu0 %v70
    %134 = vmatprep.subr.mxu0 0.0
    %135 = vmatpush1.msra.mxu0 %v71
    %136 = vmatprep.subr.mxu0 0.0
    %137 = vmatpush1.msra.mxu0 %v72
    %138 = vmatprep.subr.mxu0 0.0
    %139 = vmatpush1.msra.mxu0 %v73
    %140 = vmatprep.subr.mxu0 0.0
    %141 = vmatpush1.msra.mxu0 %v74
    %142 = vmatprep.subr.mxu0 0.0
    %143 = vmatpush1.msra.mxu0 %v75
    %144 = vmatprep.subr.mxu0 0.0
    %145 = vmatpush1.msra.mxu0 %v76
    %146 = vmatprep.subr.mxu0 0.0
    %147 = vmatpush1.msra.mxu0 %v77
    %148 = vmatprep.subr.mxu0 0.0
    %149 = vmatpush1.msra.mxu0 %v78
    %150 = vmatprep.subr.mxu0 0.0
    %151 = vmatpush1.msra.mxu0 %v79
    %152 = vmatprep.subr.mxu0 0.0
    %153 = vmatpush1.msra.mxu0 %v80
    %154 = vmatprep.subr.mxu0 0.0
    %155 = vmatpush1.msra.mxu0 %v81
    %156 = vmatprep.subr.mxu0 0.0
    %157 = vmatpush1.msra.mxu0 %v82
    %158 = vmatprep.subr.mxu0 0.0
    %159 = vmatpush1.msra.mxu0 %v83
    %160 = vmatprep.subr.mxu0 0.0
    %161 = vmatpush1.msra.mxu0 %v84
    %162 = vmatprep.subr.mxu0 0.0
    %163 = vmatpush1.msra.mxu0 %v85
    %164 = vmatprep.subr.mxu0 0.0
    %165 = vmatpush1.msra.mxu0 %v86
    %166 = vmatprep.subr.mxu0 0.0
    %167 = vmatpush1.msra.mxu0 %v87
    %168 = vmatprep.subr.mxu0 0.0
    %169 = vmatpush1.msra.mxu0 %v88
    %170 = vmatprep.subr.mxu0 0.0
    %171 = vmatpush1.msra.mxu0 %v89
    %172 = vmatprep.mubr.f32.mxu0 %v105
    %173 = vmatmul.mubr.f32.gmra.mrb[0].mxu0 %v104
    %v174 = vpop.f32.mrb[0].mxu0
    %v175 = vadd.f32 %v95, %v174
    %v176 = vpop.f32.mrb[0].mxu0
    %177 = vdwg.mxu0
    %vm178 = vcmask 1041408
    %v179 = vsel %vm178, %v175, -inf
    %180 = vmax.xlane.f32.xlu0 %v179
    %v181 = vpop.xlane.xlu0 %180
    %v182 = vsub.f32 %v175, %v181
    %v183 = vmul.f32 %v182, 1.442695
    %v184 = vpow.pop %v183
    %v185 = vld [vmem:[#allocation7] sm:$0xff]
    %v186 = vld [vmem:[#allocation7 + $0x8] sm:$0xff]
    %v187 = vld [vmem:[#allocation7 + $0x10] sm:$0xff]
    %v188 = vld [vmem:[#allocation7 + $0x18] sm:$0xff]
    %v189 = vld [vmem:[#allocation7 + $0x20] sm:$0xff]
    %v190 = vld [vmem:[#allocation7 + $0x28] sm:$0xff]
    %v191 = vld [vmem:[#allocation7 + $0x30] sm:$0xff]
    %v192 = vld [vmem:[#allocation7 + $0x38] sm:$0xff]
    %v193 = vld [vmem:[#allocation7 + $0x40] sm:$0xff]
    %v194 = vld [vmem:[#allocation7 + $0x48] sm:$0xff]
    %v195 = vld [vmem:[#allocation7 + $0x50] sm:$0xff]
    %v196 = vld [vmem:[#allocation7 + $0x58] sm:$0xff]
    %v197 = vld [vmem:[#allocation7 + $0x60] sm:$0xff]
    %v198 = vld [vmem:[#allocation7 + $0x68] sm:$0xff]
    %v199 = vld [vmem:[#allocation7 + $0x70] sm:$0xff]
    %v200 = vld [vmem:[#allocation7 + $0x78] sm:$0xff]
    %201 = vmatprep.subr.mxu0 0.0
    %202 = vmatpush1.msra.mxu0 %v185
    %203 = vmatprep.subr.mxu0 0.0
    %204 = vmatpush1.msra.mxu0 %v186
    %205 = vmatprep.subr.mxu0 0.0
    %206 = vmatpush1.msra.mxu0 %v187
    %207 = vmatprep.subr.mxu0 0.0
    %208 = vmatpush1.msra.mxu0 %v188
    %209 = vmatprep.subr.mxu0 0.0
    %210 = vmatpush1.msra.mxu0 %v189
    %211 = vmatprep.subr.mxu0 0.0
    %212 = vmatpush1.msra.mxu0 %v190
    %213 = vmatprep.subr.mxu0 0.0
    %214 = vmatpush1.msra.mxu0 %v191
    %215 = vmatprep.subr.mxu0 0.0
    %216 = vmatpush1.msra.mxu0 %v192
    %217 = vmatprep.subr.mxu0 0.0
    %218 = vmatpush1.msra.mxu0 %v193
    %219 = vmatprep.subr.mxu0 0.0
    %220 = vmatpush1.msra.mxu0 %v194
    %221 = vmatprep.subr.mxu0 0.0
    %222 = vmatpush1.msra.mxu0 %v195
    %223 = vmatprep.subr.mxu0 0.0
    %224 = vmatpush1.msra.mxu0 %v196
    %225 = vmatprep.subr.mxu0 0.0
    %226 = vmatpush1.msra.mxu0 %v197
    %227 = vmatprep.subr.mxu0 0.0
    %228 = vmatpush1.msra.mxu0 %v198
    %229 = vmatprep.subr.mxu0 0.0
    %230 = vmatpush1.msra.mxu0 %v199
    %231 = vmatprep.subr.mxu0 0.0
    %232 = vmatpush1.msra.mxu0 %v200
    %233 = vmatprep.subr.mxu0 0.0
    %234 = vmatpush1.msra.mxu0 0.0
    %235 = vmatprep.subr.mxu0 0.0
    %236 = vmatpush1.msra.mxu0 0.0
    %237 = vmatprep.subr.mxu0 0.0
    %238 = vmatpush1.msra.mxu0 0.0
    %239 = vmatprep.subr.mxu0 0.0
    %240 = vmatpush1.msra.mxu0 0.0
    %241 = vmatprep.subr.mxu0 0.0
    %242 = vmatpush1.msra.mxu0 0.0
    %243 = vmatprep.subr.mxu0 0.0
    %244 = vmatpush1.msra.mxu0 0.0
    %245 = vmatprep.subr.mxu0 0.0
    %246 = vmatpush1.msra.mxu0 0.0
    %247 = vmatprep.subr.mxu0 0.0
    %248 = vmatpush1.msra.mxu0 0.0
    %249 = vmatprep.subr.mxu0 0.0
    %250 = vmatpush1.msra.mxu0 0.0
    %251 = vmatprep.subr.mxu0 0.0
    %252 = vmatpush1.msra.mxu0 0.0
    %253 = vmatprep.subr.mxu0 0.0
    %254 = vmatpush1.msra.mxu0 0.0
    %255 = vmatprep.subr.mxu0 0.0
    %256 = vmatpush1.msra.mxu0 0.0
    %257 = vmatprep.subr.mxu0 0.0
    %258 = vmatpush1.msra.mxu0 0.0
    %259 = vmatprep.subr.mxu0 0.0
    %260 = vmatpush1.msra.mxu0 0.0
    %261 = vmatprep.subr.mxu0 0.0
    %262 = vmatpush1.msra.mxu0 0.0
    %263 = vmatprep.subr.mxu0 0.0
    %264 = vmatpush1.msra.mxu0 0.0
    %265 = vmatprep.mubr.f32.mxu0 0.0
    %266 = vmatmul.mubr.f32.gmra.mrb[0].mxu0 %v184
    %v267 = vpop.f32.mrb[0].mxu0
    %v268 = vadd.f32 0.0, %v267
    %v269 = vpop.f32.mrb[0].mxu0
    %270 = vdwg.mxu0
    %v271 = vrcp.pop %v268
    %v272 = vmul.f32 %v268, %v271
    %v273 = vsub.f32 2.0, %v272
    %v274 = vmul.f32 %v271, %v273
    %v275 = vmul.f32 %v184, %v274
    %276 = vst [vmem:[#allocation8] sm:$0x3] %v275
    // Predicated region
    $region30: #{tpu_custom_call.1} parent=1 // pred_check
      _
    $region31: #{tpu_custom_call.1} parent=1 // pred_check_branch
      %278 = sbr.rel (0) target = $region33
    $region32: #{tpu_custom_call.1} parent=1 // pred_region
      %s280 = ssub.s32 32, 32
      %281 = vsyncadd [#allocation4], %s280
      %s283 = sshll.u32 [#allocation8], 4
      %s284 = int_to_ptr.vmem [resolvable:$true] %s283
      %286 = dma.vmem_to_hbm [thread:$0]  %s284, 32, %s4, [#allocation4]
    $region33: #{tpu_custom_call.1} parent=1 // pred_fallthru
      _
    // Predicated region
    $region34: #{tpu_custom_call.1} parent=1 // pred_check
      _
    $region35: #{tpu_custom_call.1} parent=1 // pred_check_branch
      %288 = sbr.rel (0) target = $region37
    $region36: #{tpu_custom_call.1} parent=1 // pred_region
      %289 = dma.done [#allocation4], 32
    $region37: #{tpu_custom_call.1} parent=1 // pred_fallthru
      _
    %290 = vsyncpa [#allocation3], 1
    %291 = vsyncpa [#allocation6], 1
    %292 = vsyncpa [#allocation4], 1

</llo_original>
